<compile_context>
chip_gen: v7x
topology: tpu7x:2x2x1
jax: 0.10.0
libtpu: 0.0.40
codegen_flags: <defaults>
</compile_context>

<pallas_src>
import jax
import jax.numpy as jnp
from jax import lax
from jax.experimental import pallas as pl
from jax.experimental.pallas import tpu as pltpu


# ------------------------------ hardware budget -------------------------------

def _tpu_vmem_capacity():
    """Returns (VMEM bytes per TensorCore, query_succeeded)."""
    try:
        cap = int(pltpu.get_tpu_info().vmem_capacity_bytes)
        if cap > 0:
            return cap, True
    except Exception:
        pass
    # Conservative fallback: safe on every generation (v7x has 64 MiB / TC).
    return 64 << 20, False


def _vmem_limit(need_bytes, vmem_cap):
    # Leave headroom for Mosaic internal scratch; never exceed physical VMEM.
    ceiling = vmem_cap - (8 << 20)
    return int(min(max(need_bytes + (2 << 20), 32 << 20), ceiling))


def _pick_hw_tile(C, HW, itemsize, vmem_cap):
    # Bigger blocks amortize the ~0.35 us per-grid-step overhead.  Keep
    # 4 double-buffered blocks (+ slack) under the generation's scoped limit:
    # ~5 MiB blocks on v7x (64 MiB VMEM), ~8 MiB on v5e/v6e (128 MiB VMEM).
    target = (5 << 20) if vmem_cap <= (64 << 20) else (8 << 20)
    t = (target // max(C * itemsize, 1)) // 128 * 128
    t = max(t, 128)
    if t >= HW:
        return HW          # single tile; block dim == full array dim is always legal
    return t
    # TODO(synk): add a channel-tiling grid axis for C*itemsize > ~48 KiB per
    # lane column (C >~ 12k at f32), where even a 128-lane tile overshoots.


# --------------------------- fused single-pass kernel -------------------------

def _cse_fused_kernel(u_ref, w1_ref, w2_ref, o_ref):
    # u_ref: (1, C, HW); w1_ref: (C2, C) (pre-scaled by 1/HW); w2_ref: (C, C2)
    c2, c = w1_ref.shape

    # Global average pool: f32 sum over the lane (HW) axis; 1/HW folded in w1.
    z = jnp.sum(u_ref[0].astype(jnp.float32), axis=1, keepdims=True)       # (C, 1)

    # Tiny 1x1 "convs" on the VPU (broadcast-mul + lane reduce; no MXU padding).
    s = jnp.sum(w1_ref[...] * z.reshape(1, c), axis=1, keepdims=True)      # (C2, 1)
    e = jnp.sum(w2_ref[...] * s.reshape(1, c2), axis=1, keepdims=True)     # (C, 1)

    # Cast gate to output dtype *before* the big broadcast multiply.
    gate = jax.nn.sigmoid(e).astype(o_ref.dtype)                           # (C, 1)

    # Fresh read of the tile (no fp32 copy kept live across the gate math).
    o_ref[0] = u_ref[0] * gate


def _cse_single_pass(u, w1, w2, out_dtype, vmem_cap):
    N, C, HW = u.shape
    C2 = w1.shape[0]
    itemsize = jnp.dtype(out_dtype).itemsize
    # in + out blocks double buffered + resident weights (counted x2 to be safe).
    need = 4 * C * HW * itemsize + 4 * C2 * C * 4

    return pl.pallas_call(
        _cse_fused_kernel,
        out_shape=jax.ShapeDtypeStruct((N, C, HW), out_dtype),
        grid_spec=pltpu.PrefetchScalarGridSpec(
            num_scalar_prefetch=0,
            grid=(N,),
            in_specs=[
                pl.BlockSpec((1, C, HW), lambda n: (n, 0, 0)),
                pl.BlockSpec((C2, C), lambda n: (0, 0)),
                pl.BlockSpec((C, C2), lambda n: (0, 0)),
            ],
            out_specs=pl.BlockSpec((1, C, HW), lambda n: (n, 0, 0)),
        ),
        compiler_params=pltpu.CompilerParams(
            dimension_semantics=("parallel",),
            vmem_limit_bytes=_vmem_limit(need, vmem_cap),
        ),
        cost_estimate=pl.CostEstimate(
            flops=int(2 * N * C * HW + 4 * N * C * C2),
            transcendentals=int(N * C),
            bytes_accessed=int(2 * N * C * HW * itemsize),
        ),
    )(u, w1, w2)


# ------------------------------ two-pass kernels -------------------------------

def _make_pool_accum_kernel(hw, t_hw):
    """Pool kernel for N > 1: grid (N, n_hw), accumulates into (1, C, 1) f32."""
    ragged = (hw % t_hw) != 0

    def kernel(u_ref, s_ref):
        h = pl.program_id(1)

        @pl.when(h == 0)
        def _():
            s_ref[...] = jnp.zeros_like(s_ref)

        x = u_ref[0].astype(jnp.float32)                                  # (C, t_hw)
        if ragged:
            pos = h * t_hw + lax.broadcasted_iota(jnp.int32, x.shape, 1)
            x = jnp.where(pos < hw, x, 0.0)                               # mask OOB tail
        s_ref[0] += jnp.sum(x, axis=1, keepdims=True)

    return kernel


def _make_pool_partial_kernel(hw, t_hw):
    """Pool kernel for N == 1: grid (n_hw,), fully parallel per-tile partial sums."""
    ragged = (hw % t_hw) != 0

    def kernel(u_ref, p_ref):
        h = pl.program_id(0)
        x = u_ref[0].astype(jnp.float32)                                  # (C, t_hw)
        if ragged:
            pos = h * t_hw + lax.broadcasted_iota(jnp.int32, x.shape, 1)
            x = jnp.where(pos < hw, x, 0.0)
        p_ref[0] = jnp.sum(x, axis=1, keepdims=True).reshape(1, -1)       # (1, C)

    return kernel


def _cse_scale_kernel(u_ref, g_ref, o_ref):
    # u_ref/o_ref: (1, C, t_hw); g_ref: (1, C, 1) already in output dtype.
    o_ref[0] = u_ref[0] * g_ref[0]


def _cse_two_pass(u, w1, w2, out_dtype, vmem_cap, hw_tile=None):
    N, C, HW = u.shape
    itemsize = jnp.dtype(out_dtype).itemsize

    t_hw = hw_tile if hw_tile is not None else _pick_hw_tile(C, HW, itemsize, vmem_cap)
    t_hw = min(t_hw, HW)
    n_hw = pl.cdiv(HW, t_hw)

    # ---------------- pass 1: pooled sums (f32); gate math is hoisted -----------
    pool_need = 2 * C * t_hw * itemsize + 2 * C * 4
    pool_cost = pl.CostEstimate(
        flops=int(N * C * HW),
        transcendentals=0,
        bytes_accessed=int(N * C * HW * itemsize + N * n_hw * C * 4),
    )

    if N == 1:
        # Fully parallel over HW tiles: both v7x TensorCores stay busy at N == 1.
        partials = pl.pallas_call(
            _make_pool_partial_kernel(HW, t_hw),
            out_shape=jax.ShapeDtypeStruct((n_hw, 1, C), jnp.float32),
            grid_spec=pltpu.PrefetchScalarGridSpec(
                num_scalar_prefetch=0,
                grid=(n_hw,),
                in_specs=[pl.BlockSpec((1, C, t_hw), lambda h: (0, 0, h))],
                out_specs=pl.BlockSpec((1, 1, C), lambda h: (h, 0, 0)),
            ),
            compiler_params=pltpu.CompilerParams(
                dimension_semantics=("parallel",),
                vmem_limit_bytes=_vmem_limit(pool_need, vmem_cap),
            ),
            cost_estimate=pool_cost,
        )(u)
        sums = jnp.sum(partials, axis=0)                                   # (1, C) f32
    else:
        sums3 = pl.pallas_call(
            _make_pool_accum_kernel(HW, t_hw),
            out_shape=jax.ShapeDtypeStruct((N, C, 1), jnp.float32),
            grid_spec=pltpu.PrefetchScalarGridSpec(
                num_scalar_prefetch=0,
                grid=(N, n_hw),
                in_specs=[pl.BlockSpec((1, C, t_hw), lambda n, h: (n, 0, h))],
                out_specs=pl.BlockSpec((1, C, 1), lambda n, h: (n, 0, 0)),
            ),
            compiler_params=pltpu.CompilerParams(
                dimension_semantics=("parallel", "arbitrary"),
                vmem_limit_bytes=_vmem_limit(pool_need, vmem_cap),
            ),
            cost_estimate=pool_cost,
        )(u)
        sums = sums3[:, :, 0]                                              # (N, C) f32

    # Tiny gate math on (N, C): plain JAX, negligible next to the HBM passes.
    s = sums @ w1.T                                        # (N, C2); 1/HW folded in w1
    e = s @ w2.T                                           # (N, C)
    gate = jax.nn.sigmoid(e).astype(out_dtype)[:, :, None]  # (N, C, 1) in out dtype

    # ------------- pass 2: broadcast multiply, parallel over (N, HW tiles) ------
    scale_need = 4 * C * t_hw * itemsize + 2 * C * itemsize
    out = pl.pallas_call(
        _cse_scale_kernel,
        out_shape=jax.ShapeDtypeStruct((N, C, HW), out_dtype),
        grid_spec=pltpu.PrefetchScalarGridSpec(
            num_scalar_prefetch=0,
            grid=(N, n_hw),
            in_specs=[
                pl.BlockSpec((1, C, t_hw), lambda n, h: (n, 0, h)),
                pl.BlockSpec((1, C, 1), lambda n, h: (n, 0, 0)),
            ],
            out_specs=pl.BlockSpec((1, C, t_hw), lambda n, h: (n, 0, h)),
        ),
        compiler_params=pltpu.CompilerParams(
            dimension_semantics=("parallel", "parallel"),
            vmem_limit_bytes=_vmem_limit(scale_need, vmem_cap),
        ),
        cost_estimate=pl.CostEstimate(
            flops=int(N * C * HW),
            transcendentals=0,
            bytes_accessed=int(2 * N * C * HW * itemsize + N * C * itemsize),
        ),
    )(u, gate)
    return out


# ----------------------------------- wrapper -----------------------------------

def cse_forward(U, w_squeeze, w_excite, *, force_two_pass=False, hw_tile=None):
    """cSE forward.

    U: (N, C, H, W); w_squeeze: (C//2, C) or (C//2, C, 1, 1);
    w_excite: (C, C//2) or (C, C//2, 1, 1).
    """
    if w_squeeze.ndim == 4:
        w_squeeze = w_squeeze[:, :, 0, 0]
    if w_excite.ndim == 4:
        w_excite = w_excite[:, :, 0, 0]

    N, C, H, W = U.shape
    HW = H * W
    C2 = w_squeeze.shape[0]
    dtype = U.dtype
    itemsize = jnp.dtype(dtype).itemsize

    if hw_tile is not None:
        assert hw_tile >= HW or hw_tile % 128 == 0, "hw_tile must be a multiple of 128"

    # Fold the 1/HW mean scale into the squeeze weights (kernels only sum).
    w1 = w_squeeze.astype(jnp.float32) / float(HW)          # (C2, C)
    w2 = w_excite.astype(jnp.float32)                       # (C, C2)

    u = U.reshape(N, C, HW)                                  # no padding, no slicing

    vmem_cap, cap_known = _tpu_vmem_capacity()
    fused_need = 4 * C * HW * itemsize + 4 * C2 * C * 4
    fused_threshold = int(0.65 * vmem_cap)                   # ~83 MiB @128, ~42 MiB @64

    # On v7x (2 TensorCores, 64 MiB VMEM each) a single-image fused call keeps
    # one core idle; prefer the HW-parallel two-pass path for large N == 1 inputs.
    prefer_two_pass_megacore = (
        cap_known and vmem_cap <= (64 << 20) and N == 1
        and C * HW * itemsize >= (8 << 20)
    )

    use_two_pass = (force_two_pass
                    or fused_need > fused_threshold
                    or prefer_two_pass_megacore)

    if use_two_pass:
        out = _cse_two_pass(u, w1, w2, dtype, vmem_cap, hw_tile=hw_tile)
    else:
        out = _cse_single_pass(u, w1, w2, dtype, vmem_cap)

    return out.reshape(N, C, H, W)


# ---------------------------------- reference -----------------------------------

def _cse_reference(U, w_squeeze, w_excite):
    z = jnp.mean(U.astype(jnp.float32), axis=(2, 3))              # (N, C)
    s = jnp.einsum("oc,nc->no", w_squeeze.astype(jnp.float32), z)  # (N, C//2)
    e = jnp.einsum("oc,nc->no", w_excite.astype(jnp.float32), s)   # (N, C)
    g = jax.nn.sigmoid(e)[:, :, None, None]                        # (N, C, 1, 1)
    return (U.astype(jnp.float32) * g).astype(U.dtype)


if __name__ == "__main__":
    N, C, H, W = 2, 4, 16, 16
    key = jax.random.PRNGKey(0)
    k_u, k_w1, k_w2, k_u1 = jax.random.split(key, 4)

    U = jax.random.normal(k_u, (N, C, H, W), dtype=jnp.float32)
    # Conv_Squeeze: Conv2d(C, C//2, 1, bias=False) -> weight (C//2, C, 1, 1)
    w_squeeze = jax.random.normal(k_w1, (C // 2, C), dtype=jnp.float32) * 0.5
    # Conv_Excitation: Conv2d(C//2, C, 1, bias=False) -> weight (C, C//2, 1, 1)
    w_excite = jax.random.normal(k_w2, (C, C // 2), dtype=jnp.float32) * 0.5

    ref = _cse_reference(U, w_squeeze, w_excite)

    # Fused single-pass path (default for these shapes).
    out = jax.block_until_ready(cse_forward(U, w_squeeze, w_excite))
    assert out.shape == (N, C, H, W)
    assert jnp.allclose(out, ref, atol=1e-5, rtol=1e-5), "fused path mismatch"

    # Two-pass path, N > 1 (accumulating pool).
    out2 = jax.block_until_ready(
        cse_forward(U, w_squeeze, w_excite, force_two_pass=True))
    assert jnp.allclose(out2, ref, atol=1e-5, rtol=1e-5), "two-pass (N>1) mismatch"

    # Two-pass path, N == 1 with a ragged HW tail (14*14 = 196, tile 128):
    # exercises the HW-parallel partial-sum pool, in-kernel tail masking and
    # Pallas masked edge stores -- no wrapper pad/slice anywhere.
    U1 = jax.random.normal(k_u1, (1, C, 14, 14), dtype=jnp.float32)
    ref1 = _cse_reference(U1, w_squeeze, w_excite)
    out3 = jax.block_until_ready(
        cse_forward(U1, w_squeeze, w_excite, force_two_pass=True, hw_tile=128))
    assert out3.shape == (1, C, 14, 14)
    assert jnp.allclose(out3, ref1, atol=1e-5, rtol=1e-5), "two-pass (N==1) mismatch"

    print("KERNEL_OK")
</pallas_src>

<mosaic_0001>
module attributes {stable_mosaic.version = 11 : i64} {
  func.func @_cse_fused_kernel(%arg0: i32, %arg1: memref<1x4x256xf32, #tpu.memory_space<vmem>>, %arg2: memref<2x4xf32, #tpu.memory_space<vmem>>, %arg3: memref<4x2xf32, #tpu.memory_space<vmem>>, %arg4: memref<1x4x256xf32, #tpu.memory_space<vmem>>) attributes {dimension_semantics = [#tpu.dimension_semantics<parallel>], iteration_bounds = array<i64: 2>, scalar_prefetch = 0 : i64, scratch_operands = 0 : i64, tpu.core_type = #tpu.core_type<tc>, window_params = [{transform_indices = @transform_0, window_bounds = array<i64: 1, 4, 256>}, {pipeline_mode = #tpu.pipeline_mode<synchronous>, transform_indices = @transform_1, window_bounds = array<i64: 2, 4>}, {pipeline_mode = #tpu.pipeline_mode<synchronous>, transform_indices = @transform_2, window_bounds = array<i64: 4, 2>}, {transform_indices = @transform_3, window_bounds = array<i64: 1, 4, 256>}]} {
    %c0 = arith.constant 0 : index
    %c0_0 = arith.constant 0 : index
    %c0_1 = arith.constant 0 : index
    %0 = vector.load %arg1[%c0, %c0_0, %c0_1] : memref<1x4x256xf32, #tpu.memory_space<vmem>>, vector<1x4x256xf32>
    %1 = vector.shape_cast %0 : vector<1x4x256xf32> to vector<4x256xf32>
    %cst = arith.constant dense<0.000000e+00> : vector<4xf32>
    %2 = vector.multi_reduction <add>, %1, %cst [1] : vector<4x256xf32> to vector<4xf32>
    %3 = vector.shape_cast %2 : vector<4xf32> to vector<4x1xf32>
    %c0_2 = arith.constant 0 : index
    %c0_3 = arith.constant 0 : index
    %4 = vector.load %arg2[%c0_2, %c0_3] : memref<2x4xf32, #tpu.memory_space<vmem>>, vector<2x4xf32>
    %5 = vector.shape_cast %3 : vector<4x1xf32> to vector<1x4xf32>
    %6 = vector.broadcast %5 : vector<1x4xf32> to vector<2x4xf32>
    %7 = arith.mulf %4, %6 : vector<2x4xf32>
    %cst_4 = arith.constant dense<0.000000e+00> : vector<2xf32>
    %8 = vector.multi_reduction <add>, %7, %cst_4 [1] : vector<2x4xf32> to vector<2xf32>
    %9 = vector.shape_cast %8 : vector<2xf32> to vector<2x1xf32>
    %c0_5 = arith.constant 0 : index
    %c0_6 = arith.constant 0 : index
    %10 = vector.load %arg3[%c0_5, %c0_6] : memref<4x2xf32, #tpu.memory_space<vmem>>, vector<4x2xf32>
    %11 = vector.shape_cast %9 : vector<2x1xf32> to vector<1x2xf32>
    %12 = vector.broadcast %11 : vector<1x2xf32> to vector<4x2xf32>
    %13 = arith.mulf %10, %12 : vector<4x2xf32>
    %cst_7 = arith.constant dense<0.000000e+00> : vector<4xf32>
    %14 = vector.multi_reduction <add>, %13, %cst_7 [1] : vector<4x2xf32> to vector<4xf32>
    %15 = vector.shape_cast %14 : vector<4xf32> to vector<4x1xf32>
    %16 = arith.negf %15 : vector<4x1xf32>
    %17 = math.exp %16 : vector<4x1xf32>
    %cst_8 = arith.constant 1.000000e+00 : f32
    %18 = vector.broadcast %cst_8 : f32 to vector<4x1xf32>
    %19 = arith.addf %18, %17 : vector<4x1xf32>
    %20 = arith.divf %18, %19 : vector<4x1xf32>
    %c0_9 = arith.constant 0 : index
    %c0_10 = arith.constant 0 : index
    %c0_11 = arith.constant 0 : index
    %21 = vector.load %arg1[%c0_9, %c0_10, %c0_11] : memref<1x4x256xf32, #tpu.memory_space<vmem>>, vector<1x4x256xf32>
    %22 = vector.shape_cast %21 : vector<1x4x256xf32> to vector<4x256xf32>
    %23 = vector.broadcast %20 : vector<4x1xf32> to vector<4x256xf32>
    %24 = arith.mulf %22, %23 : vector<4x256xf32>
    %c0_12 = arith.constant 0 : index
    %c0_13 = arith.constant 0 : index
    %c0_14 = arith.constant 0 : index
    %25 = vector.load %arg4[%c0_12, %c0_13, %c0_14] : memref<1x4x256xf32, #tpu.memory_space<vmem>>, vector<1x4x256xf32>
    %26 = vector.shape_cast %25 : vector<1x4x256xf32> to vector<4x256xf32>
    %27 = vector.shape_cast %24 : vector<4x256xf32> to vector<1x4x256xf32>
    tpu.vector_store %arg4[%c0_12, %c0_13, %c0_14], %27 {strides = array<i32>} : memref<1x4x256xf32, #tpu.memory_space<vmem>>, vector<1x4x256xf32>,
    return
  }
  func.func @transform_0(%arg0: i32) -> (i32, i32, i32) {
    %c0_i32 = arith.constant 0 : i32
    %c0_i32_0 = arith.constant 0 : i32
    %c0_i32_1 = arith.constant 0 : i32
    return %arg0, %c0_i32, %c0_i32_0 : i32, i32, i32
  }
  func.func @transform_1(%arg0: i32) -> (i32, i32) {
    %c0_i32 = arith.constant 0 : i32
    %c0_i32_0 = arith.constant 0 : i32
    %c0_i32_1 = arith.constant 0 : i32
    return %c0_i32, %c0_i32_0 : i32, i32
  }
  func.func @transform_2(%arg0: i32) -> (i32, i32) {
    %c0_i32 = arith.constant 0 : i32
    %c0_i32_0 = arith.constant 0 : i32
    %c0_i32_1 = arith.constant 0 : i32
    return %c0_i32, %c0_i32_0 : i32, i32
  }
  func.func @transform_3(%arg0: i32) -> (i32, i32, i32) {
    %c0_i32 = arith.constant 0 : i32
    %c0_i32_0 = arith.constant 0 : i32
    %c0_i32_1 = arith.constant 0 : i32
    return %arg0, %c0_i32, %c0_i32_0 : i32, i32, i32
  }
}

</mosaic_0001>

<llo_original>
// kernel: tpu_custom_call.1
$region0: #{tpu_custom_call.1}
  #allocation0 [shape = 'u32[]', space=smem, size = 0x4, offset = 0x4, fixed_abs, tag = 'smem constant byte address 0x4 - core index']
  #allocation1 [shape = 'u32[144,128]{1,0:T(1,128)}', space=vmem, size = 0x12000, scoped, tag = 'internal scratch']
  %s0 = inlined_call_operand.hbm [shape: f32[2,4,256], index: 0, kind: input, shape index: {}]
  %s1 = inlined_call_operand.vmem [shape: f32[2,4], index: 1, kind: input, shape index: {}]
  %s2 = inlined_call_operand.vmem [shape: f32[4,2], index: 2, kind: input, shape index: {}]
  %s3 = inlined_call_operand.hbm [shape: f32[2,4,256], index: 3, kind: output, shape index: {}]
  %s4 = sld [smem:[#allocation0]]
  $region49: #{tpu_custom_call.1} parent=0
    _
  %s6 = ssub.s32 1, %s4
  %s7 = scalar_select 0, %s6, %s4
  $region1: #{tpu_custom_call.1} parent=0
    #allocation2 [shape = 'u8[8192]{0}', space=vmem, size = 0x2000, scoped, tag = 'input window, operand 0']
    #allocation3 [shape = 's32[2]{0}', space=sflag, size = 0x8, scoped, tag = 'scoped memory for tpu_custom_call.1']
    #allocation4 [shape = 's32[2]{0}', space=sflag, size = 0x8, scoped, tag = 'scoped memory for tpu_custom_call.1']
    #allocation5 [shape = 'u8[8192]{0}', space=vmem, size = 0x2000, scoped, tag = 'output window, operand 0']
    %8 = vsyncpa [#allocation3], 0
    %s9 = scalar_lea.sflag [#allocation3], 1
    %10 = vsyncpa %s9, 0
    %11 = vsyncpa [#allocation4], 0
    %s12 = scalar_lea.sflag [#allocation4], 1
    %13 = vsyncpa %s12, 0
    loop: start=0, step=1, limit=4
    $region2: #{tpu_custom_call.1} parent=1 // loop_pre_header
      _
    $region3: #{tpu_custom_call.1} parent=1 // loop_header
      %s15 = sphi 0, %s19
      %p16 = scmp.ge.s32.totalorder %s15, 4
      %s25 = sphi 0, %s27
      %s28 = sphi 0, %s25
      %s29 = sphi 0, %s28
      %s45 = sphi 0, %s29
      %s49 = sphi 0, %s49
      %s51 = sphi 0, %s49
      %s52 = sphi 0, %s51
      %s66 = sphi 0, %s52
      %s70 = sphi 0, %s70
      %s72 = sphi 0, %s70
      %s73 = sphi 0, %s72
      %s87 = sphi 0, %s73
      %s93 = sphi 0, %s95
      %s96 = sphi 0, %s93
      %s97 = sphi 0, %s96
      %s113 = sphi 0, %s97
    $region4: #{tpu_custom_call.1} parent=1 // loop_header_branch
      %18 = sbr.rel (%p16) target = $region8
    $region5: #{tpu_custom_call.1} parent=1 // loop_body
      %s20 = ssub.s32 %s15, 1
      %s21 = ssub.s32 %s15, 2
      %s22 = sadd.s32 %s15, 1
      %s23 = ssub.s32 %s15, %s22
      %p24 = scmp.eq.s32.totalorder %s23, 0
      %s26 = sadd.s32 %s25, 1
      %s27 = scalar_select %p24, %s25, %s26
      %p30 = pneg %p24
      %p31 = scmp.eq.s32.totalorder %s15, 1
      %p32 = por %p30, %p31
      %p33 = scmp.ne.s32.totalorder %s25, %s28
      %p34 = scmp.eq.s32.totalorder %s15, 0
      %p35 = por %p33, %p34
      %p36 = scmp.ne.s32.totalorder %s25, %s28
      %p37 = scmp.eq.s32.totalorder %s20, 1
      %p38 = por %p36, %p37
      %p39 = scmp.ne.s32.totalorder %s28, %s29
      %p40 = scmp.eq.s32.totalorder %s20, 0
      %p41 = por %p39, %p40
      %p42 = scmp.ne.s32.totalorder %s28, %s29
      %p43 = scmp.eq.s32.totalorder %s21, 1
      %p44 = por %p42, %p43
      %p46 = scmp.ne.s32.totalorder %s29, %s45
      %p47 = scmp.eq.s32.totalorder %s21, 0
      %p48 = por %p46, %p47
      %s50 = sadd.s32 %s49, 1
      %p53 = scmp.eq.s32.totalorder %s15, 1
      %p54 = scmp.ne.s32.totalorder %s49, %s51
      %p55 = scmp.eq.s32.totalorder %s15, 0
      %p56 = por %p54, %p55
      %p57 = scmp.ne.s32.totalorder %s49, %s51
      %p58 = scmp.eq.s32.totalorder %s20, 1
      %p59 = por %p57, %p58
      %p60 = scmp.ne.s32.totalorder %s51, %s52
      %p61 = scmp.eq.s32.totalorder %s20, 0
      %p62 = por %p60, %p61
      %p63 = scmp.ne.s32.totalorder %s51, %s52
      %p64 = scmp.eq.s32.totalorder %s21, 1
      %p65 = por %p63, %p64
      %p67 = scmp.ne.s32.totalorder %s52, %s66
      %p68 = scmp.eq.s32.totalorder %s21, 0
      %p69 = por %p67, %p68
      %s71 = sadd.s32 %s70, 1
      %p74 = scmp.eq.s32.totalorder %s15, 1
      %p75 = scmp.ne.s32.totalorder %s70, %s72
      %p76 = scmp.eq.s32.totalorder %s15, 0
      %p77 = por %p75, %p76
      %p78 = scmp.ne.s32.totalorder %s70, %s72
      %p79 = scmp.eq.s32.totalorder %s20, 1
      %p80 = por %p78, %p79
      %p81 = scmp.ne.s32.totalorder %s72, %s73
      %p82 = scmp.eq.s32.totalorder %s20, 0
      %p83 = por %p81, %p82
      %p84 = scmp.ne.s32.totalorder %s72, %s73
      %p85 = scmp.eq.s32.totalorder %s21, 1
      %p86 = por %p84, %p85
      %p88 = scmp.ne.s32.totalorder %s73, %s87
      %p89 = scmp.eq.s32.totalorder %s21, 0
      %p90 = por %p88, %p89
      %s91 = ssub.s32 %s15, %s22
      %p92 = scmp.eq.s32.totalorder %s91, 0
      %s94 = sadd.s32 %s93, 1
      %s95 = scalar_select %p92, %s93, %s94
      %p98 = pneg %p92
      %p99 = scmp.eq.s32.totalorder %s15, 1
      %p100 = por %p98, %p99
      %p101 = scmp.ne.s32.totalorder %s93, %s96
      %p102 = scmp.eq.s32.totalorder %s15, 0
      %p103 = por %p101, %p102
      %p104 = scmp.ne.s32.totalorder %s93, %s96
      %p105 = scmp.eq.s32.totalorder %s20, 1
      %p106 = por %p104, %p105
      %p107 = scmp.ne.s32.totalorder %s96, %s97
      %p108 = scmp.eq.s32.totalorder %s20, 0
      %p109 = por %p107, %p108
      %p110 = scmp.ne.s32.totalorder %s96, %s97
      %p111 = scmp.eq.s32.totalorder %s21, 1
      %p112 = por %p110, %p111
      %p114 = scmp.ne.s32.totalorder %s97, %s113
      %p115 = scmp.eq.s32.totalorder %s21, 0
      %p116 = por %p114, %p115
      %p117 = scmp.le.s32.totalorder 1, %s15
      %p118 = scmp.lt.s32.totalorder %s15, 3
      %p119 = pnand %p117, %p118
      %p120 = pneg %p119
      // Predicated region
      $region9: #{tpu_custom_call.1} parent=5 // pred_check
        _
      $region10: #{tpu_custom_call.1} parent=5 // pred_check_branch
        %122 = sbr.rel (%p119) target = $region12
      $region11: #{tpu_custom_call.1} parent=5 // pred_region
        %s123 = ssub.s32 %s15, 1
        // Predicated region
        $region13: #{tpu_custom_call.1} parent=11 // pred_check
          %p124 = pneg %p62
        $region14: #{tpu_custom_call.1} parent=11 // pred_check_branch
          %126 = sbr.rel (%p124) target = $region16
        $region15: #{tpu_custom_call.1} parent=11 // pred_region
          _
        $region16: #{tpu_custom_call.1} parent=11 // pred_fallthru
          _
        // Predicated region
        $region17: #{tpu_custom_call.1} parent=11 // pred_check
          %p127 = pneg %p83
        $region18: #{tpu_custom_call.1} parent=11 // pred_check_branch
          %129 = sbr.rel (%p127) target = $region20
        $region19: #{tpu_custom_call.1} parent=11 // pred_region
          _
        $region20: #{tpu_custom_call.1} parent=11 // pred_fallthru
          _
      $region12: #{tpu_custom_call.1} parent=5 // pred_fallthru
        _
      %p130 = scmp.lt.s32.totalorder %s15, 2
      // Predicated region
      $region21: #{tpu_custom_call.1} parent=5 // pred_check
        %p131 = pneg %p130
      $region22: #{tpu_custom_call.1} parent=5 // pred_check_branch
        %133 = sbr.rel (%p131) target = $region24
      $region23: #{tpu_custom_call.1} parent=5 // pred_region
        // Predicated region
        $region25: #{tpu_custom_call.1} parent=23 // pred_check
          %p134 = pneg %p35
        $region26: #{tpu_custom_call.1} parent=23 // pred_check_branch
          %136 = sbr.rel (%p134) target = $region28
        $region27: #{tpu_custom_call.1} parent=23 // pred_region
          %s137 = sand.u32 %s25, 1
          %s138 = scalar_lea.sflag [#allocation3], %s137
          %s139 = sand.u32 %s25, 1
          %s140 = smul.addr %s139, 8
          %s141 = scalar_lea.vmem [#allocation2], %s140
          %s143 = ssub.s32 128, 128
          %144 = vsyncadd %s138, %s143
          %s145 = smul.addr %s15, 2
          %s146 = smul.addr %s145, 64
          %s147 = scalar_lea.hbm %s0, %s146
          %s149 = sshll.u32 %s141, 4
          %s150 = int_to_ptr.vmem [resolvable:$true] %s149
          %152 = dma.hbm_to_vmem [thread:$0]  %s147, 128, %s150, %s138
        $region28: #{tpu_custom_call.1} parent=23 // pred_fallthru
          _
      $region24: #{tpu_custom_call.1} parent=5 // pred_fallthru
        _
      %p153 = scmp.le.s32.totalorder 1, %s15
      %p154 = scmp.lt.s32.totalorder %s15, 3
      %p155 = pnand %p153, %p154
      %p156 = pneg %p155
      // Predicated region
      $region29: #{tpu_custom_call.1} parent=5 // pred_check
        _
      $region30: #{tpu_custom_call.1} parent=5 // pred_check_branch
        %158 = sbr.rel (%p155) target = $region32
      $region31: #{tpu_custom_call.1} parent=5 // pred_region
        %s159 = ssub.s32 %s15, 1
        %s160 = sand.u32 %s28, 1
        %s161 = scalar_lea.sflag [#allocation3], %s160
        %s162 = sand.u32 %s28, 1
        %s163 = smul.addr %s162, 8
        %s164 = scalar_lea.vmem [#allocation2], %s163
        // Predicated region
        $region33: #{tpu_custom_call.1} parent=31 // pred_check
          %p165 = pneg %p41
        $region34: #{tpu_custom_call.1} parent=31 // pred_check_branch
          %167 = sbr.rel (%p165) target = $region36
        $region35: #{tpu_custom_call.1} parent=31 // pred_region
          %168 = dma.done %s161, 128
        $region36: #{tpu_custom_call.1} parent=31 // pred_fallthru
          _
        %s169 = sand.u32 %s28, 1
        %s170 = scalar_lea.sflag [#allocation3], %s169
        %s171 = sand.u32 %s28, 1
        %s172 = smul.addr %s171, 8
        %s173 = scalar_lea.vmem [#allocation2], %s172
        %p174 = pneg %p41
        %p175 = pneg %p38
        %p176 = pneg %p62
        %p177 = pneg %p59
        %p178 = pneg %p83
        %p179 = pneg %p80
        %p180 = pneg %p109
        %p181 = pneg %p106
        %s182 = sand.u32 %s96, 1
        %s183 = scalar_lea.sflag [#allocation4], %s182
        %s184 = sand.u32 %s96, 1
        %s185 = smul.addr %s184, 8
        %s186 = scalar_lea.vmem [#allocation5], %s185
        %v187 = vld [vmem:[%s164] sm:$0xff]
        %v189 = vcombine.high %v187, %v187
        %vm191 = vcmask 1043456
        %v192 = vsel %vm191, %v187, 0.0
        %v193 = vsel %vm191, %v189, 0.0
        %v194 = vadd.f32 %v192, %v193
        %195 = vadd.xlane.f32.xlu0 %v194
        %v196 = vpop.xlane.xlu0 %195
        %v197 = vld [vmem:[%s1] sm:$0x3]
        %v199 = vlaneseq
        %v200 = vand.u32 %v199, 127
        %v201 = vlaneseq
        %v202 = vshrl.u32 %v201, 7
        %v203 = vsub.s32 %v200, %v202
        %v204 = vrot.slane %v196, %v203
        %v206 = vmul.f32 %v197, %v204
        %vm207 = vcmask 25600
        %v208 = vsel %vm207, %v206, 0.0
        %209 = vadd.xlane.f32.xlu0 %v208
        %v210 = vpop.xlane.xlu0 %209
        %v211 = vld [vmem:[%s2] sm:$0xf]
        %v213 = vlaneseq
        %v214 = vshrl.u32 %v213, 7
        %v215 = vsub.s32 %v200, %v214
        %v216 = vrot.slane %v210, %v215
        %vm217 = vcmask 1042434
        %v218 = vsel %vm217, %v216, %v216
        %vm219 = vcmask 1043459
        %v220 = vsel %vm219, %v216, %v218
        %v222 = vmul.f32 %v211, %v220
        %vm223 = vcmask 11264
        %v224 = vsel %vm223, %v222, 0.0
        %225 = vadd.xlane.f32.xlu0 %v224
        %v226 = vpop.xlane.xlu0 %225
        %v227 = vxor.u32 %v226, 2147483648
        %v228 = vmul.f32 %v227, 1.442695
        %v229 = vpow.pop %v228
        %v230 = vadd.f32 %v229, 1.0
        %v231 = vrcp.pop %v230
        %v232 = vmul.f32 1.0, %v231
        %v235 = vunpack.c.l.s4 839922192
        %v236 = vunpack.c.0.s8 %v235
        %v237 = vlaneseq
        %v238 = vshrl.u32 %v237, 7
        %v239 = vsub.s32 %v236, %v238
        %v240 = vrot.slane %v232, %v239
        %v242 = vmul.f32 %v187, %v240
        %243 = vst [vmem:[%s186] sm:$0xff] %v242
        %s244 = sand.u32 %s96, 1
        %s245 = scalar_lea.sflag [#allocation4], %s244
        %s246 = sand.u32 %s96, 1
        %s247 = smul.addr %s246, 8
        %s248 = scalar_lea.vmem [#allocation5], %s247
        // Predicated region
        $region37: #{tpu_custom_call.1} parent=31 // pred_check
          %p249 = pneg %p106
        $region38: #{tpu_custom_call.1} parent=31 // pred_check_branch
          %251 = sbr.rel (%p249) target = $region40
        $region39: #{tpu_custom_call.1} parent=31 // pred_region
          %s253 = ssub.s32 128, 128
          %254 = vsyncadd %s245, %s253
          %s255 = smul.addr %s20, 2
          %s256 = smul.addr %s255, 64
          %s257 = scalar_lea.hbm %s3, %s256
          %s259 = sshll.u32 %s248, 4
          %s260 = int_to_ptr.vmem [resolvable:$true] %s259
          %262 = dma.vmem_to_hbm [thread:$0]  %s260, 128, %s257, %s245
        $region40: #{tpu_custom_call.1} parent=31 // pred_fallthru
          _
      $region32: #{tpu_custom_call.1} parent=5 // pred_fallthru
        _
      %p263 = scmp.le.s32.totalorder 2, %s15
      // Predicated region
      $region41: #{tpu_custom_call.1} parent=5 // pred_check
        %p264 = pneg %p263
      $region42: #{tpu_custom_call.1} parent=5 // pred_check_branch
        %266 = sbr.rel (%p264) target = $region44
      $region43: #{tpu_custom_call.1} parent=5 // pred_region
        %s267 = ssub.s32 %s15, 2
        // Predicated region
        $region45: #{tpu_custom_call.1} parent=43 // pred_check
          %p268 = pneg %p112
        $region46: #{tpu_custom_call.1} parent=43 // pred_check_branch
          %270 = sbr.rel (%p268) target = $region48
        $region47: #{tpu_custom_call.1} parent=43 // pred_region
          %s271 = sand.u32 %s97, 1
          %s272 = scalar_lea.sflag [#allocation4], %s271
          %s273 = sand.u32 %s97, 1
          %s274 = smul.addr %s273, 8
          %s275 = scalar_lea.vmem [#allocation5], %s274
          %276 = dma.done %s272, 128
        $region48: #{tpu_custom_call.1} parent=43 // pred_fallthru
          _
      $region44: #{tpu_custom_call.1} parent=5 // pred_fallthru
        _
    $region6: #{tpu_custom_call.1} parent=1 // loop_footer
      %s19 = sadd.s32 1, %s15
    $region7: #{tpu_custom_call.1} parent=1 // loop_footer_branch
      %14 = sbr.rel target = $region3
    $region8: #{tpu_custom_call.1} parent=1 // loop_exit
      _
    %277 = vsyncpa [#allocation3], 1
    %s278 = scalar_lea.sflag [#allocation3], 1
    %279 = vsyncpa %s278, 1
    %280 = vsyncpa [#allocation4], 1
    %s281 = scalar_lea.sflag [#allocation4], 1
    %282 = vsyncpa %s281, 1

</llo_original>
